<compile_context>
chip_gen: v5e
topology: v5e:2x2
jax: 0.10.0
libtpu: 0.0.40
codegen_flags: <defaults>
</compile_context>

<pallas_src>
import functools
import math

import jax
import jax.numpy as jnp
from jax.experimental import pallas as pl
from jax.experimental.pallas import tpu as pltpu


def _differ_fused_kernel(x_ref, w_ref, b_ref, o_ref, state_ref, *,
                         sents_num, max_sents_num, group_sizes):
    """Runs one DifferLayer per grid step along the layer axis.

    x_ref:     [Bt, S, H]  input embeddings (amplifier-grouped sentence order)
    w_ref:     [M, H, H]   this layer's amplifier weights (bf16, pre-transposed: y = d @ w)
    b_ref:     [M, H]      this layer's amplifier biases (f32)
    o_ref:     [Bt, S, H]  output embeddings (written only on the last layer)
    state_ref: [Bt, S, H]  f32 VMEM carry of activations across layers
    """
    l = pl.program_id(1)

    @pl.when(l == 0)
    def _init():
        state_ref[...] = x_ref[...].astype(jnp.float32)

    x = state_ref[...]                                   # [Bt, S, H] f32
    bt = x.shape[0]
    s = sents_num

    # Vectorized difference:  v0 - mean(others) = x * S/(S-1) - sum(x)/(S-1)
    s_sum = jnp.sum(x, axis=1, keepdims=True)            # [Bt, 1, H]
    scale = jnp.float32(s / (s - 1))
    inv = jnp.float32(1.0 / (s - 1))
    d = x * scale - s_sum * inv                          # [Bt, S, H] f32 (pure VPU)

    bias = b_ref[...]                                    # [M, H] f32

    # Grouped matmuls: sentences are already ordered by (i % M), so each amplifier's
    # rows are a contiguous slice along the sentence axis.
    pieces = []
    off = 0
    for a in range(max_sents_num):
        g = group_sizes[a]
        if g == 0:
            continue
        da = d[:, off:off + g, :].reshape(bt * g, -1).astype(jnp.bfloat16)  # [Bt*g, H]
        ya = jnp.dot(da, w_ref[a], preferred_element_type=jnp.float32)      # MXU, f32 acc
        ya = ya + bias[a:a + 1, :]                                           # [1, H] bcast
        pieces.append(ya.reshape(bt, g, -1))
        off += g

    y = pieces[0] if len(pieces) == 1 else jnp.concatenate(pieces, axis=1)   # [Bt, S, H]
    y = y + x                                                                # residual (f32)

    state_ref[...] = y

    @pl.when(l == pl.num_programs(1) - 1)
    def _store():
        o_ref[...] = y.astype(o_ref.dtype)               # single lane-dense store


def differ_forward(x, w_t, b, *, max_sents_num=None, mask_cls=None, b_tile=None):
    """Differ.forward: the whole layer stack in ONE pallas_call.

    x:   [B, S, H]
    w_t: [L, M, H, H]  amplifier weights, pre-transposed (y = d @ w_t[l, a])
    b:   [L, M, H]     amplifier biases
    """
    del mask_cls  # TODO(synk): mask_cls is accepted but unused by the reference PyTorch module.
    B, S, H = x.shape
    L, M = w_t.shape[0], w_t.shape[1]
    if max_sents_num is None:
        max_sents_num = M
    assert max_sents_num == M
    if S < 2:
        raise ValueError("Differ requires sents_num >= 2 (module divides by sents_num - 1).")

    # Permute sentences so that all sentences sharing an amplifier (i % M) are
    # contiguous.  The layer is equivariant under this permutation, so it is applied
    # once before the fused stack and inverted once afterwards.
    perm = [i for a in range(M) for i in range(a, S, M)]
    inv_perm = [0] * S
    for j, i in enumerate(perm):
        inv_perm[i] = j
    group_sizes = tuple(len(range(a, S, M)) for a in range(M))

    if b_tile is None:
        b_tile = B
    assert B % b_tile == 0
    nbt = B // b_tile

    xp = jnp.take(x, jnp.asarray(perm, dtype=jnp.int32), axis=1)

    # VMEM budget: double-buffered weight/bias/x/out blocks + f32 carry + headroom.
    x_item = jnp.dtype(x.dtype).itemsize
    w_item = jnp.dtype(w_t.dtype).itemsize
    need = (2 * M * H * H * w_item          # weights (double buffered)
            + 2 * M * H * 4                  # biases
            + 4 * b_tile * S * H * x_item    # x and out blocks (double buffered)
            + b_tile * S * H * 4             # f32 carry scratch
            + (4 << 20))                     # headroom
    vmem_limit = int(min(max(need, 16 * 2**20), 64 * 2**20))

    kernel = functools.partial(
        _differ_fused_kernel,
        sents_num=S, max_sents_num=M, group_sizes=group_sizes)

    out_p = pl.pallas_call(
        kernel,
        out_shape=jax.ShapeDtypeStruct((B, S, H), x.dtype),
        grid_spec=pltpu.PrefetchScalarGridSpec(
            num_scalar_prefetch=0,
            grid=(nbt, L),
            in_specs=[
                pl.BlockSpec((b_tile, S, H), lambda bt, l: (bt, 0, 0)),
                pl.BlockSpec((None, M, H, H), lambda bt, l: (l, 0, 0, 0)),
                pl.BlockSpec((None, M, H), lambda bt, l: (l, 0, 0)),
            ],
            out_specs=pl.BlockSpec((b_tile, S, H), lambda bt, l: (bt, 0, 0)),
            scratch_shapes=[pltpu.VMEM((b_tile, S, H), jnp.float32)],
        ),
        compiler_params=pltpu.CompilerParams(
            dimension_semantics=("parallel", "arbitrary"),
            vmem_limit_bytes=vmem_limit,
        ),
    )(xp, w_t, b)

    return jnp.take(out_p, jnp.asarray(inv_perm, dtype=jnp.int32), axis=1)


# ---------------------------------------------------------------------------
# Pure-JAX reference (mirrors the PyTorch module per-sentence loop exactly,
# computed in f32 with the same bf16 weight values upcast).
# ---------------------------------------------------------------------------
def differ_reference(x, w_t, b, *, max_sents_num):
    L = w_t.shape[0]
    w = w_t.astype(jnp.float32)
    bias = b.astype(jnp.float32)
    x = x.astype(jnp.float32)
    for l in range(L):
        S = x.shape[1]
        s_sum = jnp.sum(x, axis=1)
        outs = []
        for i in range(S):
            v0 = x[:, i, :]
            v1 = (s_sum - v0) / (S - 1)
            a = i % max_sents_num
            res = (v0 - v1) @ w[l, a] + bias[l, a] + v0
            outs.append(res[:, None, :])
        x = jnp.concatenate(outs, axis=1)
    return x


def init_params(key, hidden_size, max_sents_num, differ_layer_num):
    """PyTorch nn.Linear-style uniform(-1/sqrt(H), 1/sqrt(H)); weights stored as bf16."""
    bound = 1.0 / math.sqrt(hidden_size)
    kw, kb = jax.random.split(key)
    w = jax.random.uniform(
        kw, (differ_layer_num, max_sents_num, hidden_size, hidden_size),
        minval=-bound, maxval=bound, dtype=jnp.float32)
    b = jax.random.uniform(
        kb, (differ_layer_num, max_sents_num, hidden_size),
        minval=-bound, maxval=bound, dtype=jnp.float32)
    # torch Linear stores (out, in) and computes x @ W.T; pre-transpose to (in, out).
    w_t = jnp.swapaxes(w, -1, -2).astype(jnp.bfloat16)
    return w_t, b


if __name__ == "__main__":
    B, S, H = 2, 8, 128         # batch, sentences, hidden (H multiple of 128 -> lane-dense)
    MAX_SENTS_NUM = 4           # S > MAX_SENTS_NUM exercises the modulo wrap
    DIFFER_LAYER_NUM = 2

    key = jax.random.PRNGKey(0)
    kx, kp = jax.random.split(key)
    x = jax.random.normal(kx, (B, S, H), dtype=jnp.float32)
    w_t, b = init_params(kp, H, MAX_SENTS_NUM, DIFFER_LAYER_NUM)

    out = differ_forward(x, w_t, b, max_sents_num=MAX_SENTS_NUM)
    out = jax.block_until_ready(out)

    ref = differ_reference(x, w_t, b, max_sents_num=MAX_SENTS_NUM)
    assert out.shape == (B, S, H)
    # Kernel casts the dot LHS to bf16 (weights are bf16 in both); allow bf16-level error.
    assert jnp.allclose(out, ref, atol=2e-2, rtol=2e-2), "mismatch vs reference"

    print("KERNEL_OK")
</pallas_src>

<mosaic_0001>
module attributes {stable_mosaic.version = 11 : i64} {
  func.func @_differ_fused_kernel(%arg0: i32, %arg1: i32, %arg2: memref<2x8x128xf32, #tpu.memory_space<vmem>>, %arg3: memref<1x4x128x128xbf16, #tpu.memory_space<vmem>>, %arg4: memref<1x4x128xf32, #tpu.memory_space<vmem>>, %arg5: memref<2x8x128xf32, #tpu.memory_space<vmem>>, %arg6: memref<2x8x128xf32, #tpu.memory_space<vmem>>) attributes {dimension_semantics = [#tpu.dimension_semantics<parallel>, #tpu.dimension_semantics<arbitrary>], iteration_bounds = array<i64: 1, 2>, scalar_prefetch = 0 : i64, scratch_operands = 1 : i64, tpu.core_type = #tpu.core_type<tc>, window_params = [{transform_indices = @transform_0, window_bounds = array<i64: 2, 8, 128>}, {transform_indices = @transform_1, window_bounds = array<i64: 1, 4, 128, 128>}, {transform_indices = @transform_2, window_bounds = array<i64: 1, 4, 128>}, {transform_indices = @transform_3, window_bounds = array<i64: 2, 8, 128>}]} {
    %c0_i32 = arith.constant 0 : i32
    %0 = arith.cmpi eq, %arg1, %c0_i32 : i32
    %1 = arith.extui %0 : i1 to i32
    %c0_i32_0 = arith.constant 0 : i32
    %2 = arith.cmpi ne, %1, %c0_i32_0 : i32
    scf.if %2 {
      %c0_29 = arith.constant 0 : index
      %c0_30 = arith.constant 0 : index
      %c0_31 = arith.constant 0 : index
      %60 = vector.load %arg2[%c0_29, %c0_30, %c0_31] : memref<2x8x128xf32, #tpu.memory_space<vmem>>, vector<2x8x128xf32>
      %c0_32 = arith.constant 0 : index
      %c0_33 = arith.constant 0 : index
      %c0_34 = arith.constant 0 : index
      %61 = vector.load %arg6[%c0_32, %c0_33, %c0_34] : memref<2x8x128xf32, #tpu.memory_space<vmem>>, vector<2x8x128xf32>
      tpu.vector_store %arg6[%c0_32, %c0_33, %c0_34], %60 {strides = array<i32>} : memref<2x8x128xf32, #tpu.memory_space<vmem>>, vector<2x8x128xf32>,
    } else {
    }
    %c0 = arith.constant 0 : index
    %c0_1 = arith.constant 0 : index
    %c0_2 = arith.constant 0 : index
    %3 = vector.load %arg6[%c0, %c0_1, %c0_2] : memref<2x8x128xf32, #tpu.memory_space<vmem>>, vector<2x8x128xf32>
    %cst = arith.constant dense<0.000000e+00> : vector<2x128xf32>
    %4 = vector.multi_reduction <add>, %3, %cst [1] : vector<2x8x128xf32> to vector<2x128xf32>
    %5 = vector.shape_cast %4 : vector<2x128xf32> to vector<2x1x128xf32>
    %cst_3 = arith.constant 1.14285719 : f32
    %6 = vector.broadcast %cst_3 : f32 to vector<2x8x128xf32>
    %7 = arith.mulf %3, %6 : vector<2x8x128xf32>
    %cst_4 = arith.constant 0.142857149 : f32
    %8 = vector.broadcast %cst_4 : f32 to vector<2x1x128xf32>
    %9 = arith.mulf %5, %8 : vector<2x1x128xf32>
    %10 = vector.broadcast %9 : vector<2x1x128xf32> to vector<2x8x128xf32>
    %11 = arith.subf %7, %10 : vector<2x8x128xf32>
    %c0_5 = arith.constant 0 : index
    %c0_6 = arith.constant 0 : index
    %c0_7 = arith.constant 0 : index
    %12 = vector.load %arg4[%c0_5, %c0_6, %c0_7] : memref<1x4x128xf32, #tpu.memory_space<vmem>>, vector<1x4x128xf32>
    %13 = vector.shape_cast %12 : vector<1x4x128xf32> to vector<4x128xf32>
    %14 = vector.extract_strided_slice %11 {offsets = [0, 0, 0], sizes = [2, 2, 128], strides = [1, 1, 1]} : vector<2x8x128xf32> to vector<2x2x128xf32>
    %15 = vector.shape_cast %14 : vector<2x2x128xf32> to vector<4x128xf32>
    %16 = arith.truncf %15 : vector<4x128xf32> to vector<4x128xbf16>
    %c0_8 = arith.constant 0 : index
    %c0_9 = arith.constant 0 : index
    %c0_10 = arith.constant 0 : index
    %c0_11 = arith.constant 0 : index
    %17 = vector.load %arg3[%c0_8, %c0_9, %c0_10, %c0_11] : memref<1x4x128x128xbf16, #tpu.memory_space<vmem>>, vector<1x1x128x128xbf16>
    %18 = vector.shape_cast %17 : vector<1x1x128x128xbf16> to vector<128x128xbf16>
    %cst_12 = arith.constant dense<0.000000e+00> : vector<4x128xf32>
    %19 = tpu.matmul %16, %18, %cst_12 {dimension_numbers = #tpu.dot_dimension_numbers<[1], [0], [0], [1], [0, 0, 1, 1], [], []>} : vector<4x128xbf16>, vector<128x128xbf16>, vector<4x128xf32> -> vector<4x128xf32>
    %20 = vector.extract_strided_slice %13 {offsets = [0, 0], sizes = [1, 128], strides = [1, 1]} : vector<4x128xf32> to vector<1x128xf32>
    %21 = vector.broadcast %20 : vector<1x128xf32> to vector<4x128xf32>
    %22 = arith.addf %19, %21 : vector<4x128xf32>
    %23 = vector.shape_cast %22 : vector<4x128xf32> to vector<2x2x128xf32>
    %24 = vector.extract_strided_slice %11 {offsets = [0, 2, 0], sizes = [2, 2, 128], strides = [1, 1, 1]} : vector<2x8x128xf32> to vector<2x2x128xf32>
    %25 = vector.shape_cast %24 : vector<2x2x128xf32> to vector<4x128xf32>
    %26 = arith.truncf %25 : vector<4x128xf32> to vector<4x128xbf16>
    %c0_13 = arith.constant 0 : index
    %c1 = arith.constant 1 : index
    %c0_14 = arith.constant 0 : index
    %c0_15 = arith.constant 0 : index
    %27 = vector.load %arg3[%c0_13, %c1, %c0_14, %c0_15] : memref<1x4x128x128xbf16, #tpu.memory_space<vmem>>, vector<1x1x128x128xbf16>
    %28 = vector.shape_cast %27 : vector<1x1x128x128xbf16> to vector<128x128xbf16>
    %cst_16 = arith.constant dense<0.000000e+00> : vector<4x128xf32>
    %29 = tpu.matmul %26, %28, %cst_16 {dimension_numbers = #tpu.dot_dimension_numbers<[1], [0], [0], [1], [0, 0, 1, 1], [], []>} : vector<4x128xbf16>, vector<128x128xbf16>, vector<4x128xf32> -> vector<4x128xf32>
    %30 = vector.extract_strided_slice %13 {offsets = [1, 0], sizes = [1, 128], strides = [1, 1]} : vector<4x128xf32> to vector<1x128xf32>
    %31 = vector.broadcast %30 : vector<1x128xf32> to vector<4x128xf32>
    %32 = arith.addf %29, %31 : vector<4x128xf32>
    %33 = vector.shape_cast %32 : vector<4x128xf32> to vector<2x2x128xf32>
    %34 = vector.extract_strided_slice %11 {offsets = [0, 4, 0], sizes = [2, 2, 128], strides = [1, 1, 1]} : vector<2x8x128xf32> to vector<2x2x128xf32>
    %35 = vector.shape_cast %34 : vector<2x2x128xf32> to vector<4x128xf32>
    %36 = arith.truncf %35 : vector<4x128xf32> to vector<4x128xbf16>
    %c0_17 = arith.constant 0 : index
    %c2 = arith.constant 2 : index
    %c0_18 = arith.constant 0 : index
    %c0_19 = arith.constant 0 : index
    %37 = vector.load %arg3[%c0_17, %c2, %c0_18, %c0_19] : memref<1x4x128x128xbf16, #tpu.memory_space<vmem>>, vector<1x1x128x128xbf16>
    %38 = vector.shape_cast %37 : vector<1x1x128x128xbf16> to vector<128x128xbf16>
    %cst_20 = arith.constant dense<0.000000e+00> : vector<4x128xf32>
    %39 = tpu.matmul %36, %38, %cst_20 {dimension_numbers = #tpu.dot_dimension_numbers<[1], [0], [0], [1], [0, 0, 1, 1], [], []>} : vector<4x128xbf16>, vector<128x128xbf16>, vector<4x128xf32> -> vector<4x128xf32>
    %40 = vector.extract_strided_slice %13 {offsets = [2, 0], sizes = [1, 128], strides = [1, 1]} : vector<4x128xf32> to vector<1x128xf32>
    %41 = vector.broadcast %40 : vector<1x128xf32> to vector<4x128xf32>
    %42 = arith.addf %39, %41 : vector<4x128xf32>
    %43 = vector.shape_cast %42 : vector<4x128xf32> to vector<2x2x128xf32>
    %44 = vector.extract_strided_slice %11 {offsets = [0, 6, 0], sizes = [2, 2, 128], strides = [1, 1, 1]} : vector<2x8x128xf32> to vector<2x2x128xf32>
    %45 = vector.shape_cast %44 : vector<2x2x128xf32> to vector<4x128xf32>
    %46 = arith.truncf %45 : vector<4x128xf32> to vector<4x128xbf16>
    %c0_21 = arith.constant 0 : index
    %c3 = arith.constant 3 : index
    %c0_22 = arith.constant 0 : index
    %c0_23 = arith.constant 0 : index
    %47 = vector.load %arg3[%c0_21, %c3, %c0_22, %c0_23] : memref<1x4x128x128xbf16, #tpu.memory_space<vmem>>, vector<1x1x128x128xbf16>
    %48 = vector.shape_cast %47 : vector<1x1x128x128xbf16> to vector<128x128xbf16>
    %cst_24 = arith.constant dense<0.000000e+00> : vector<4x128xf32>
    %49 = tpu.matmul %46, %48, %cst_24 {dimension_numbers = #tpu.dot_dimension_numbers<[1], [0], [0], [1], [0, 0, 1, 1], [], []>} : vector<4x128xbf16>, vector<128x128xbf16>, vector<4x128xf32> -> vector<4x128xf32>
    %50 = vector.extract_strided_slice %13 {offsets = [3, 0], sizes = [1, 128], strides = [1, 1]} : vector<4x128xf32> to vector<1x128xf32>
    %51 = vector.broadcast %50 : vector<1x128xf32> to vector<4x128xf32>
    %52 = arith.addf %49, %51 : vector<4x128xf32>
    %53 = vector.shape_cast %52 : vector<4x128xf32> to vector<2x2x128xf32>
    %54 = tpu.concatenate %23, %33, %43, %53 in 1 : vector<2x2x128xf32>, vector<2x2x128xf32>, vector<2x2x128xf32>, vector<2x2x128xf32> -> vector<2x8x128xf32>
    %55 = arith.addf %54, %3 : vector<2x8x128xf32>
    %c0_25 = arith.constant 0 : index
    %c0_26 = arith.constant 0 : index
    %c0_27 = arith.constant 0 : index
    %56 = vector.load %arg6[%c0_25, %c0_26, %c0_27] : memref<2x8x128xf32, #tpu.memory_space<vmem>>, vector<2x8x128xf32>
    tpu.vector_store %arg6[%c0_25, %c0_26, %c0_27], %55 {strides = array<i32>} : memref<2x8x128xf32, #tpu.memory_space<vmem>>, vector<2x8x128xf32>,
    %c1_i32 = arith.constant 1 : i32
    %57 = arith.cmpi eq, %arg1, %c1_i32 : i32
    %58 = arith.extui %57 : i1 to i32
    %c0_i32_28 = arith.constant 0 : i32
    %59 = arith.cmpi ne, %58, %c0_i32_28 : i32
    scf.if %59 {
      %c0_29 = arith.constant 0 : index
      %c0_30 = arith.constant 0 : index
      %c0_31 = arith.constant 0 : index
      %60 = vector.load %arg5[%c0_29, %c0_30, %c0_31] : memref<2x8x128xf32, #tpu.memory_space<vmem>>, vector<2x8x128xf32>
      tpu.vector_store %arg5[%c0_29, %c0_30, %c0_31], %55 {strides = array<i32>} : memref<2x8x128xf32, #tpu.memory_space<vmem>>, vector<2x8x128xf32>,
    } else {
    }
    return
  }
  func.func @transform_0(%arg0: i32, %arg1: i32) -> (i32, i32, i32) {
    %c0_i32 = arith.constant 0 : i32
    %c0_i32_0 = arith.constant 0 : i32
    %c0_i32_1 = arith.constant 0 : i32
    return %arg0, %c0_i32, %c0_i32_0 : i32, i32, i32
  }
  func.func @transform_1(%arg0: i32, %arg1: i32) -> (i32, i32, i32, i32) {
    %c0_i32 = arith.constant 0 : i32
    %c0_i32_0 = arith.constant 0 : i32
    %c0_i32_1 = arith.constant 0 : i32
    %c0_i32_2 = arith.constant 0 : i32
    return %arg1, %c0_i32, %c0_i32_0, %c0_i32_1 : i32, i32, i32, i32
  }
  func.func @transform_2(%arg0: i32, %arg1: i32) -> (i32, i32, i32) {
    %c0_i32 = arith.constant 0 : i32
    %c0_i32_0 = arith.constant 0 : i32
    %c0_i32_1 = arith.constant 0 : i32
    return %arg1, %c0_i32, %c0_i32_0 : i32, i32, i32
  }
  func.func @transform_3(%arg0: i32, %arg1: i32) -> (i32, i32, i32) {
    %c0_i32 = arith.constant 0 : i32
    %c0_i32_0 = arith.constant 0 : i32
    %c0_i32_1 = arith.constant 0 : i32
    return %arg0, %c0_i32, %c0_i32_0 : i32, i32, i32
  }
}

</mosaic_0001>

<llo_original>
// kernel: tpu_custom_call.1
$region0: #{tpu_custom_call.1}
  #allocation0 [shape = 'u32[]', space=smem, size = 0x4, offset = 0x4, fixed_abs, tag = 'smem constant byte address 0x4 - core index']
  #allocation1 [shape = 'u32[72,128]{1,0:T(1,128)}', space=vmem, size = 0x9000, scoped, tag = 'internal scratch']
  #allocation2 [shape = 'f32[2,8,128]{2,1,0:T(8,128)}', space=vmem, size = 0x2000, scoped, tag = 'scratch operand']
  %s0 = inlined_call_operand.hbm [shape: f32[2,8,128], index: 0, kind: input, shape index: {}]
  %s1 = inlined_call_operand.hbm [shape: bf16[2,4,128,128], index: 1, kind: input, shape index: {}]
  %s2 = inlined_call_operand.hbm [shape: f32[2,4,128], index: 2, kind: input, shape index: {}]
  %s3 = inlined_call_operand.hbm [shape: f32[2,8,128], index: 3, kind: output, shape index: {}]
  %s4 = sld [smem:[#allocation0]]
  $region65: #{tpu_custom_call.1} parent=0
    _
  %s6 = ssub.s32 1, %s4
  %s7 = scalar_select 0, %s6, %s4
  $region1: #{tpu_custom_call.1} parent=0
    #allocation3 [shape = 'u8[8192]{0}', space=vmem, size = 0x2000, scoped, tag = 'input window, operand 0, single buffered']
    #allocation4 [shape = 's32[2]{0}', space=sflag, size = 0x8, scoped, tag = 'scoped memory for tpu_custom_call.1']
    #allocation5 [shape = 's32[2]{0}', space=sflag, size = 0x8, scoped, tag = 'scoped memory for tpu_custom_call.1']
    #allocation6 [shape = 'u8[262144]{0}', space=vmem, size = 0x40000, scoped, tag = 'input window, operand 1']
    #allocation7 [shape = 's32[2]{0}', space=sflag, size = 0x8, scoped, tag = 'scoped memory for tpu_custom_call.1']
    #allocation8 [shape = 'u8[4096]{0}', space=vmem, size = 0x1000, scoped, tag = 'input window, operand 2']
    #allocation9 [shape = 'u8[8192]{0}', space=vmem, size = 0x2000, scoped, tag = 'output window, operand 0, single buffered']
    %8 = vsyncpa [#allocation4], 0
    %9 = vsyncpa [#allocation7], 0
    %s10 = scalar_lea.sflag [#allocation7], 1
    %11 = vsyncpa %s10, 0
    %12 = vsyncpa [#allocation5], 0
    loop: start=0, step=1, limit=4
    $region2: #{tpu_custom_call.1} parent=1 // loop_pre_header
      _
    $region3: #{tpu_custom_call.1} parent=1 // loop_header
      %s14 = sphi 0, %s18
      %p15 = scmp.ge.s32.totalorder %s14, 4
      %s21 = sphi 0, %s33
      %s22 = sphi 0, %s29
      %s23 = sphi 0, %s21
      %s24 = sphi 0, %s22
      %s25 = sphi 0, %s23
      %s26 = sphi 0, %s24
      %s36 = sphi 0, %s38
      %s39 = sphi 0, %s36
      %s40 = sphi 0, %s39
      %s56 = sphi 0, %s40
      %s62 = sphi 0, %s64
      %s65 = sphi 0, %s62
      %s66 = sphi 0, %s65
      %s82 = sphi 0, %s66
      %s88 = sphi 0, %s90
      %s91 = sphi 0, %s88
      %s92 = sphi 0, %s91
      %s108 = sphi 0, %s92
      %s114 = sphi 0, %s116
      %s117 = sphi 0, %s114
      %s118 = sphi 0, %s117
      %s134 = sphi 0, %s118
    $region4: #{tpu_custom_call.1} parent=1 // loop_header_branch
      %17 = sbr.rel (%p15) target = $region8
    $region5: #{tpu_custom_call.1} parent=1 // loop_body
      %s19 = ssub.s32 %s14, 1
      %s20 = ssub.s32 %s14, 2
      %s27 = sadd.s32 1, %s22
      %p28 = scmp.ge.s32.totalorder %s27, 2
      %s29 = scalar_select %p28, 0, %s27
      %s30 = sadd.s32 1, %s21
      %s31 = scalar_select %p28, %s30, %s21
      %p32 = scmp.ge.s32.totalorder %s31, 1
      %s33 = scalar_select %p32, 0, %s31
      %s34 = ssub.s32 %s21, %s33
      %p35 = scmp.eq.s32.totalorder %s34, 0
      %s37 = sadd.s32 %s36, 1
      %s38 = scalar_select %p35, %s36, %s37
      %p41 = pneg %p35
      %p42 = scmp.eq.s32.totalorder %s14, 1
      %p43 = por %p41, %p42
      %p44 = scmp.ne.s32.totalorder %s36, %s39
      %p45 = scmp.eq.s32.totalorder %s14, 0
      %p46 = por %p44, %p45
      %p47 = scmp.ne.s32.totalorder %s36, %s39
      %p48 = scmp.eq.s32.totalorder %s19, 1
      %p49 = por %p47, %p48
      %p50 = scmp.ne.s32.totalorder %s39, %s40
      %p51 = scmp.eq.s32.totalorder %s19, 0
      %p52 = por %p50, %p51
      %p53 = scmp.ne.s32.totalorder %s39, %s40
      %p54 = scmp.eq.s32.totalorder %s20, 1
      %p55 = por %p53, %p54
      %p57 = scmp.ne.s32.totalorder %s40, %s56
      %p58 = scmp.eq.s32.totalorder %s20, 0
      %p59 = por %p57, %p58
      %s60 = ssub.s32 %s22, %s29
      %p61 = scmp.eq.s32.totalorder %s60, 0
      %s63 = sadd.s32 %s62, 1
      %s64 = scalar_select %p61, %s62, %s63
      %p67 = pneg %p61
      %p68 = scmp.eq.s32.totalorder %s14, 1
      %p69 = por %p67, %p68
      %p70 = scmp.ne.s32.totalorder %s62, %s65
      %p71 = scmp.eq.s32.totalorder %s14, 0
      %p72 = por %p70, %p71
      %p73 = scmp.ne.s32.totalorder %s62, %s65
      %p74 = scmp.eq.s32.totalorder %s19, 1
      %p75 = por %p73, %p74
      %p76 = scmp.ne.s32.totalorder %s65, %s66
      %p77 = scmp.eq.s32.totalorder %s19, 0
      %p78 = por %p76, %p77
      %p79 = scmp.ne.s32.totalorder %s65, %s66
      %p80 = scmp.eq.s32.totalorder %s20, 1
      %p81 = por %p79, %p80
      %p83 = scmp.ne.s32.totalorder %s66, %s82
      %p84 = scmp.eq.s32.totalorder %s20, 0
      %p85 = por %p83, %p84
      %s86 = ssub.s32 %s22, %s29
      %p87 = scmp.eq.s32.totalorder %s86, 0
      %s89 = sadd.s32 %s88, 1
      %s90 = scalar_select %p87, %s88, %s89
      %p93 = pneg %p87
      %p94 = scmp.eq.s32.totalorder %s14, 1
      %p95 = por %p93, %p94
      %p96 = scmp.ne.s32.totalorder %s88, %s91
      %p97 = scmp.eq.s32.totalorder %s14, 0
      %p98 = por %p96, %p97
      %p99 = scmp.ne.s32.totalorder %s88, %s91
      %p100 = scmp.eq.s32.totalorder %s19, 1
      %p101 = por %p99, %p100
      %p102 = scmp.ne.s32.totalorder %s91, %s92
      %p103 = scmp.eq.s32.totalorder %s19, 0
      %p104 = por %p102, %p103
      %p105 = scmp.ne.s32.totalorder %s91, %s92
      %p106 = scmp.eq.s32.totalorder %s20, 1
      %p107 = por %p105, %p106
      %p109 = scmp.ne.s32.totalorder %s92, %s108
      %p110 = scmp.eq.s32.totalorder %s20, 0
      %p111 = por %p109, %p110
      %s112 = ssub.s32 %s21, %s33
      %p113 = scmp.eq.s32.totalorder %s112, 0
      %s115 = sadd.s32 %s114, 1
      %s116 = scalar_select %p113, %s114, %s115
      %p119 = pneg %p113
      %p120 = scmp.eq.s32.totalorder %s14, 1
      %p121 = por %p119, %p120
      %p122 = scmp.ne.s32.totalorder %s114, %s117
      %p123 = scmp.eq.s32.totalorder %s14, 0
      %p124 = por %p122, %p123
      %p125 = scmp.ne.s32.totalorder %s114, %s117
      %p126 = scmp.eq.s32.totalorder %s19, 1
      %p127 = por %p125, %p126
      %p128 = scmp.ne.s32.totalorder %s117, %s118
      %p129 = scmp.eq.s32.totalorder %s19, 0
      %p130 = por %p128, %p129
      %p131 = scmp.ne.s32.totalorder %s117, %s118
      %p132 = scmp.eq.s32.totalorder %s20, 1
      %p133 = por %p131, %p132
      %p135 = scmp.ne.s32.totalorder %s118, %s134
      %p136 = scmp.eq.s32.totalorder %s20, 0
      %p137 = por %p135, %p136
      %p138 = scmp.le.s32.totalorder 1, %s14
      %p139 = scmp.lt.s32.totalorder %s14, 3
      %p140 = pnand %p138, %p139
      %p141 = pneg %p140
      // Predicated region
      $region9: #{tpu_custom_call.1} parent=5 // pred_check
        _
      $region10: #{tpu_custom_call.1} parent=5 // pred_check_branch
        %143 = sbr.rel (%p140) target = $region12
      $region11: #{tpu_custom_call.1} parent=5 // pred_region
        %s144 = ssub.s32 %s14, 1
        // Predicated region
        $region13: #{tpu_custom_call.1} parent=11 // pred_check
          %p145 = pneg %p52
        $region14: #{tpu_custom_call.1} parent=11 // pred_check_branch
          %147 = sbr.rel (%p145) target = $region16
        $region15: #{tpu_custom_call.1} parent=11 // pred_region
          %s148 = smul.u32 2, %s23
          %150 = vsyncadd [#allocation4], 0
          %s151 = smul.addr %s148, 8
          %s152 = scalar_lea.hbm %s0, %s151
          %s153 = sshll.u32 %s152, 4
          %s154 = int_to_ptr.hbm [resolvable:$true] %s153
          %s155 = sshll.u32 [#allocation3], 4
          %s156 = int_to_ptr.vmem [resolvable:$true] %s155
          %161 = dma.hbm_to_vmem [thread:$0]  %s154, 256, %s156, [#allocation4], 128, 128, 8
        $region16: #{tpu_custom_call.1} parent=11 // pred_fallthru
          _
      $region12: #{tpu_custom_call.1} parent=5 // pred_fallthru
        _
      %p162 = scmp.lt.s32.totalorder %s14, 2
      // Predicated region
      $region17: #{tpu_custom_call.1} parent=5 // pred_check
        %p163 = pneg %p162
      $region18: #{tpu_custom_call.1} parent=5 // pred_check_branch
        %165 = sbr.rel (%p163) target = $region20
      $region19: #{tpu_custom_call.1} parent=5 // pred_region
        // Predicated region
        $region21: #{tpu_custom_call.1} parent=19 // pred_check
          %p166 = pneg %p72
        $region22: #{tpu_custom_call.1} parent=19 // pred_check_branch
          %168 = sbr.rel (%p166) target = $region24
        $region23: #{tpu_custom_call.1} parent=19 // pred_region
          %s169 = sand.u32 %s14, 1
          %s170 = scalar_lea.sflag [#allocation7], %s169
          %s171 = sand.u32 %s62, 1
          %s172 = smul.addr %s171, 256
          %s173 = scalar_lea.vmem [#allocation6], %s172
          %175 = vsyncadd %s170, 0
          %s176 = smul.addr %s22, 64
          %s177 = smul.addr %s176, 4
          %s178 = scalar_lea.hbm %s1, %s177
          %s179 = sshll.u32 %s178, 4
          %s180 = int_to_ptr.hbm [resolvable:$true] %s179
          %s181 = sshll.u32 %s173, 4
          %s182 = int_to_ptr.vmem [resolvable:$true] %s181
          %187 = dma.hbm_to_vmem [thread:$0]  %s180, 4096, %s182, %s170, 64, 64, 4
        $region24: #{tpu_custom_call.1} parent=19 // pred_fallthru
          _
        // Predicated region
        $region25: #{tpu_custom_call.1} parent=19 // pred_check
          %p188 = pneg %p98
        $region26: #{tpu_custom_call.1} parent=19 // pred_check_branch
          %190 = sbr.rel (%p188) target = $region28
        $region27: #{tpu_custom_call.1} parent=19 // pred_region
          %s191 = sand.u32 %s14, 1
          %s192 = scalar_lea.sflag [#allocation7], %s191
          %s193 = sand.u32 %s88, 1
          %s194 = smul.addr %s193, 4
          %s195 = scalar_lea.vmem [#allocation8], %s194
          %197 = vsyncadd %s192, 0
          %s198 = smul.addr %s22, 4
          %s199 = scalar_lea.hbm %s2, %s198
          %s201 = sshll.u32 %s199, 4
          %s202 = int_to_ptr.hbm [resolvable:$true] %s201
          %s203 = sshll.u32 %s195, 4
          %s204 = int_to_ptr.vmem [resolvable:$true] %s203
          %206 = dma.hbm_to_vmem [thread:$0]  %s202, 64, %s204, %s192
        $region28: #{tpu_custom_call.1} parent=19 // pred_fallthru
          _
      $region20: #{tpu_custom_call.1} parent=5 // pred_fallthru
        _
      %p207 = scmp.le.s32.totalorder 1, %s14
      %p208 = scmp.lt.s32.totalorder %s14, 3
      %p209 = pnand %p207, %p208
      %p210 = pneg %p209
      // Predicated region
      $region29: #{tpu_custom_call.1} parent=5 // pred_check
        _
      $region30: #{tpu_custom_call.1} parent=5 // pred_check_branch
        %212 = sbr.rel (%p209) target = $region32
      $region31: #{tpu_custom_call.1} parent=5 // pred_region
        %s213 = ssub.s32 %s14, 1
        // Predicated region
        $region33: #{tpu_custom_call.1} parent=31 // pred_check
          %p214 = pneg %p52
        $region34: #{tpu_custom_call.1} parent=31 // pred_check_branch
          %216 = sbr.rel (%p214) target = $region36
        $region35: #{tpu_custom_call.1} parent=31 // pred_region
          %218 = dma.done [#allocation4], 256
        $region36: #{tpu_custom_call.1} parent=31 // pred_fallthru
          _
        %s219 = sand.u32 %s19, 1
        %s220 = scalar_lea.sflag [#allocation7], %s219
        %s221 = sand.u32 %s65, 1
        %s222 = smul.addr %s221, 256
        %s223 = scalar_lea.vmem [#allocation6], %s222
        // Predicated region
        $region37: #{tpu_custom_call.1} parent=31 // pred_check
          %p224 = pneg %p78
        $region38: #{tpu_custom_call.1} parent=31 // pred_check_branch
          %226 = sbr.rel (%p224) target = $region40
        $region39: #{tpu_custom_call.1} parent=31 // pred_region
          %228 = dma.done %s220, 4096
        $region40: #{tpu_custom_call.1} parent=31 // pred_fallthru
          _
        %s229 = sand.u32 %s19, 1
        %s230 = scalar_lea.sflag [#allocation7], %s229
        %s231 = sand.u32 %s91, 1
        %s232 = smul.addr %s231, 4
        %s233 = scalar_lea.vmem [#allocation8], %s232
        // Predicated region
        $region41: #{tpu_custom_call.1} parent=31 // pred_check
          %p234 = pneg %p104
        $region42: #{tpu_custom_call.1} parent=31 // pred_check_branch
          %236 = sbr.rel (%p234) target = $region44
        $region43: #{tpu_custom_call.1} parent=31 // pred_region
          %238 = dma.done %s230, 64
        $region44: #{tpu_custom_call.1} parent=31 // pred_fallthru
          _
        %p239 = pneg %p52
        %p240 = pneg %p49
        %s241 = sand.u32 %s19, 1
        %s242 = scalar_lea.sflag [#allocation7], %s241
        %s243 = sand.u32 %s65, 1
        %s244 = smul.addr %s243, 256
        %s245 = scalar_lea.vmem [#allocation6], %s244
        %p246 = pneg %p78
        %p247 = pneg %p75
        %s248 = sand.u32 %s19, 1
        %s249 = scalar_lea.sflag [#allocation7], %s248
        %s250 = sand.u32 %s91, 1
        %s251 = smul.addr %s250, 4
        %s252 = scalar_lea.vmem [#allocation8], %s251
        %p253 = pneg %p104
        %p254 = pneg %p101
        %p255 = pneg %p130
        %p256 = pneg %p127
        %s257 = smul.u32 2, %s23
        %s258 = smul.u32 2, %s23
        %p259 = scmp.eq.s32.totalorder %s24, 0
        // Predicated region
        $region45: #{tpu_custom_call.1} parent=31 // pred_check
          %p260 = pneg %p259
        $region46: #{tpu_custom_call.1} parent=31 // pred_check_branch
          %262 = sbr.rel (%p260) target = $region48
        $region47: #{tpu_custom_call.1} parent=31 // pred_region
          %v263 = vld [vmem:[#allocation3] sm:$0xff]
          %v264 = vld [vmem:[#allocation3 + $0x8] sm:$0xff]
          %265 = vst [vmem:[#allocation2] sm:$0xff] %v263
          %266 = vst [vmem:[#allocation2 + $0x8] sm:$0xff] %v264
        $region48: #{tpu_custom_call.1} parent=31 // pred_fallthru
          _
        %v267 = vld [vmem:[#allocation2] sm:$0xff]
        %v268 = vld [vmem:[#allocation2 + $0x8] sm:$0xff]
        %v269 = vrot.slane %v267, 4
        %v270 = vadd.f32 %v267, %v269
        %v271 = vrot.slane %v270, 2
        %v272 = vadd.f32 %v270, %v271
        %v273 = vrot.slane %v272, 1
        %v274 = vadd.f32 %v272, %v273
        %v275 = vrot.slane %v268, 4
        %v276 = vadd.f32 %v268, %v275
        %v277 = vrot.slane %v276, 2
        %v278 = vadd.f32 %v276, %v277
        %v279 = vrot.slane %v278, 1
        %v280 = vadd.f32 %v278, %v279
        %v281 = vmul.f32 %v267, 1.1428572
        %v282 = vmul.f32 %v268, 1.1428572
        %v283 = vmul.f32 %v274, 0.14285715
        %v284 = vmul.f32 %v280, 0.14285715
        %v285 = vsub.f32 %v281, %v283
        %v286 = vsub.f32 %v282, %v284
        %v287 = vld [vmem:[%s233] sm:$0xf]
        %290 = vst [vmem:[#allocation1] ss:$4 sm:$0xff] %v285
        %s291 = scalar_lea.vmem [#allocation1], 1
        %292 = vst [vmem:[%s291] ss:$4 sm:$0xff] %v286
        %v293 = vld.sshfl [vmem:[#allocation1] sm:$0xff pattern:$0x73625140]
        %v295 = vpack.c.bf16 %v293, %v293
        %v296 = vld [vmem:[%s223] sm:$0xf]
        %v297 = vld [vmem:[%s223 + $0x4] sm:$0xf]
        %v298 = vld [vmem:[%s223 + $0x8] sm:$0xf]
        %v299 = vld [vmem:[%s223 + $0xc] sm:$0xf]
        %v300 = vld [vmem:[%s223 + $0x10] sm:$0xf]
        %v301 = vld [vmem:[%s223 + $0x14] sm:$0xf]
        %v302 = vld [vmem:[%s223 + $0x18] sm:$0xf]
        %v303 = vld [vmem:[%s223 + $0x1c] sm:$0xf]
        %v304 = vld [vmem:[%s223 + $0x20] sm:$0xf]
        %v305 = vld [vmem:[%s223 + $0x24] sm:$0xf]
        %v306 = vld [vmem:[%s223 + $0x28] sm:$0xf]
        %v307 = vld [vmem:[%s223 + $0x2c] sm:$0xf]
        %v308 = vld [vmem:[%s223 + $0x30] sm:$0xf]
        %v309 = vld [vmem:[%s223 + $0x34] sm:$0xf]
        %v310 = vld [vmem:[%s223 + $0x38] sm:$0xf]
        %v311 = vld [vmem:[%s223 + $0x3c] sm:$0xf]
        %v312 = vperm.slane %v287, 0
        %v329 = vunpack.c.l.b16 %v296
        %v330 = vunpack.c.l.b16 %v297
        %v331 = vunpack.c.l.b16 %v298
        %v332 = vunpack.c.l.b16 %v299
        %v333 = vunpack.c.l.b16 %v300
        %v334 = vunpack.c.l.b16 %v301
        %v335 = vunpack.c.l.b16 %v302
        %v336 = vunpack.c.l.b16 %v303
        %v337 = vunpack.c.l.b16 %v304
        %v338 = vunpack.c.l.b16 %v305
        %v339 = vunpack.c.l.b16 %v306
        %v340 = vunpack.c.l.b16 %v307
        %v341 = vunpack.c.l.b16 %v308
        %v342 = vunpack.c.l.b16 %v309
        %v343 = vunpack.c.l.b16 %v310
        %v344 = vunpack.c.l.b16 %v311
        %v345 = vpack.c.b16 %v330, %v329
        %v346 = vpack.c.b16 %v332, %v331
        %v347 = vpack.c.b16 %v334, %v333
        %v348 = vpack.c.b16 %v336, %v335
        %v349 = vpack.c.b16 %v338, %v337
        %v350 = vpack.c.b16 %v340, %v339
        %v351 = vpack.c.b16 %v342, %v341
        %v352 = vpack.c.b16 %v344, %v343
        %361 = vmatpush.bf16.msra.mxu0 %v352
        %362 = vmatpush.bf16.msra.mxu0 %v351
        %363 = vmatpush.bf16.msra.mxu0 %v350
        %364 = vmatpush.bf16.msra.mxu0 %v349
        %365 = vmatpush.bf16.msra.mxu0 %v348
        %366 = vmatpush.bf16.msra.mxu0 %v347
        %367 = vmatpush.bf16.msra.mxu0 %v346
        %368 = vmatpush.bf16.msra.mxu0 %v345
        %369 = vmatmul.bf16.gmra.mxu0 %v295
        %v370 = vpop.f32.mrf.mxu0
        %v371 = vadd.f32 %v312, %v370
        %v372 = vpop.f32.mrf.mxu0
        %373 = vdwg.mxu0
        %v375 = vrot.slane %v371, 2
        %377 = vst.sshfl [vmem:[#allocation1] sm:$0xff pattern:$0x73625140] %v285
        %s378 = scalar_lea.vmem [#allocation1], 1
        %v379 = vld [vmem:[%s378] ss:$4 sm:$0xff]
        %380 = vst.sshfl [vmem:[#allocation1 + $0x20] sm:$0xff pattern:$0x73625140] %v286
        %s381 = scalar_lea.vmem [#allocation1], 33
        %v382 = vld [vmem:[%s381] ss:$4 sm:$0xff]
        %383 = vst [vmem:[#allocation1] ss:$4 sm:$0xff] %v379
        %s384 = scalar_lea.vmem [#allocation1], 1
        %385 = vst [vmem:[%s384] ss:$4 sm:$0xff] %v382
        %v386 = vld.sshfl [vmem:[#allocation1] sm:$0xff pattern:$0x73625140]
        %v388 = vpack.c.bf16 %v386, %v386
        %s389 = scalar_lea.vmem %s223, 64 [#allocation6]
        %v390 = vld [vmem:[%s389] sm:$0xf]
        %v391 = vld [vmem:[%s389 + $0x4] sm:$0xf]
        %v392 = vld [vmem:[%s389 + $0x8] sm:$0xf]
        %v393 = vld [vmem:[%s389 + $0xc] sm:$0xf]
        %v394 = vld [vmem:[%s389 + $0x10] sm:$0xf]
        %v395 = vld [vmem:[%s389 + $0x14] sm:$0xf]
        %v396 = vld [vmem:[%s389 + $0x18] sm:$0xf]
        %v397 = vld [vmem:[%s389 + $0x1c] sm:$0xf]
        %v398 = vld [vmem:[%s389 + $0x20] sm:$0xf]
        %v399 = vld [vmem:[%s389 + $0x24] sm:$0xf]
        %v400 = vld [vmem:[%s389 + $0x28] sm:$0xf]
        %v401 = vld [vmem:[%s389 + $0x2c] sm:$0xf]
        %v402 = vld [vmem:[%s389 + $0x30] sm:$0xf]
        %v403 = vld [vmem:[%s389 + $0x34] sm:$0xf]
        %v404 = vld [vmem:[%s389 + $0x38] sm:$0xf]
        %v405 = vld [vmem:[%s389 + $0x3c] sm:$0xf]
        %v406 = vperm.slane %v287, 1
        %v423 = vunpack.c.l.b16 %v390
        %v424 = vunpack.c.l.b16 %v391
        %v425 = vunpack.c.l.b16 %v392
        %v426 = vunpack.c.l.b16 %v393
        %v427 = vunpack.c.l.b16 %v394
        %v428 = vunpack.c.l.b16 %v395
        %v429 = vunpack.c.l.b16 %v396
        %v430 = vunpack.c.l.b16 %v397
        %v431 = vunpack.c.l.b16 %v398
        %v432 = vunpack.c.l.b16 %v399
        %v433 = vunpack.c.l.b16 %v400
        %v434 = vunpack.c.l.b16 %v401
        %v435 = vunpack.c.l.b16 %v402
        %v436 = vunpack.c.l.b16 %v403
        %v437 = vunpack.c.l.b16 %v404
        %v438 = vunpack.c.l.b16 %v405
        %v439 = vpack.c.b16 %v424, %v423
        %v440 = vpack.c.b16 %v426, %v425
        %v441 = vpack.c.b16 %v428, %v427
        %v442 = vpack.c.b16 %v430, %v429
        %v443 = vpack.c.b16 %v432, %v431
        %v444 = vpack.c.b16 %v434, %v433
        %v445 = vpack.c.b16 %v436, %v435
        %v446 = vpack.c.b16 %v438, %v437
        %455 = vmatpush.bf16.msra.mxu0 %v446
        %456 = vmatpush.bf16.msra.mxu0 %v445
        %457 = vmatpush.bf16.msra.mxu0 %v444
        %458 = vmatpush.bf16.msra.mxu0 %v443
        %459 = vmatpush.bf16.msra.mxu0 %v442
        %460 = vmatpush.bf16.msra.mxu0 %v441
        %461 = vmatpush.bf16.msra.mxu0 %v440
        %462 = vmatpush.bf16.msra.mxu0 %v439
        %463 = vmatmul.bf16.gmra.mxu0 %v388
        %v464 = vpop.f32.mrf.mxu0
        %v465 = vadd.f32 %v406, %v464
        %v466 = vpop.f32.mrf.mxu0
        %467 = vdwg.mxu0
        %v469 = vrot.slane %v465, 2
        %470 = vst.sshfl [vmem:[#allocation1] sm:$0xff pattern:$0x73625140] %v285
        %s471 = scalar_lea.vmem [#allocation1], 2
        %v472 = vld [vmem:[%s471] ss:$4 sm:$0xff]
        %473 = vst.sshfl [vmem:[#allocation1 + $0x20] sm:$0xff pattern:$0x73625140] %v286
        %s474 = scalar_lea.vmem [#allocation1], 34
        %v475 = vld [vmem:[%s474] ss:$4 sm:$0xff]
        %476 = vst [vmem:[#allocation1] ss:$4 sm:$0xff] %v472
        %s477 = scalar_lea.vmem [#allocation1], 1
        %478 = vst [vmem:[%s477] ss:$4 sm:$0xff] %v475
        %v479 = vld.sshfl [vmem:[#allocation1] sm:$0xff pattern:$0x73625140]
        %v481 = vpack.c.bf16 %v479, %v479
        %s482 = scalar_lea.vmem %s223, 128 [#allocation6]
        %v483 = vld [vmem:[%s482] sm:$0xf]
        %v484 = vld [vmem:[%s482 + $0x4] sm:$0xf]
        %v485 = vld [vmem:[%s482 + $0x8] sm:$0xf]
        %v486 = vld [vmem:[%s482 + $0xc] sm:$0xf]
        %v487 = vld [vmem:[%s482 + $0x10] sm:$0xf]
        %v488 = vld [vmem:[%s482 + $0x14] sm:$0xf]
        %v489 = vld [vmem:[%s482 + $0x18] sm:$0xf]
        %v490 = vld [vmem:[%s482 + $0x1c] sm:$0xf]
        %v491 = vld [vmem:[%s482 + $0x20] sm:$0xf]
        %v492 = vld [vmem:[%s482 + $0x24] sm:$0xf]
        %v493 = vld [vmem:[%s482 + $0x28] sm:$0xf]
        %v494 = vld [vmem:[%s482 + $0x2c] sm:$0xf]
        %v495 = vld [vmem:[%s482 + $0x30] sm:$0xf]
        %v496 = vld [vmem:[%s482 + $0x34] sm:$0xf]
        %v497 = vld [vmem:[%s482 + $0x38] sm:$0xf]
        %v498 = vld [vmem:[%s482 + $0x3c] sm:$0xf]
        %v499 = vperm.slane %v287, 2
        %v516 = vunpack.c.l.b16 %v483
        %v517 = vunpack.c.l.b16 %v484
        %v518 = vunpack.c.l.b16 %v485
        %v519 = vunpack.c.l.b16 %v486
        %v520 = vunpack.c.l.b16 %v487
        %v521 = vunpack.c.l.b16 %v488
        %v522 = vunpack.c.l.b16 %v489
        %v523 = vunpack.c.l.b16 %v490
        %v524 = vunpack.c.l.b16 %v491
        %v525 = vunpack.c.l.b16 %v492
        %v526 = vunpack.c.l.b16 %v493
        %v527 = vunpack.c.l.b16 %v494
        %v528 = vunpack.c.l.b16 %v495
        %v529 = vunpack.c.l.b16 %v496
        %v530 = vunpack.c.l.b16 %v497
        %v531 = vunpack.c.l.b16 %v498
        %v532 = vpack.c.b16 %v517, %v516
        %v533 = vpack.c.b16 %v519, %v518
        %v534 = vpack.c.b16 %v521, %v520
        %v535 = vpack.c.b16 %v523, %v522
        %v536 = vpack.c.b16 %v525, %v524
        %v537 = vpack.c.b16 %v527, %v526
        %v538 = vpack.c.b16 %v529, %v528
        %v539 = vpack.c.b16 %v531, %v530
        %548 = vmatpush.bf16.msra.mxu0 %v539
        %549 = vmatpush.bf16.msra.mxu0 %v538
        %550 = vmatpush.bf16.msra.mxu0 %v537
        %551 = vmatpush.bf16.msra.mxu0 %v536
        %552 = vmatpush.bf16.msra.mxu0 %v535
        %553 = vmatpush.bf16.msra.mxu0 %v534
        %554 = vmatpush.bf16.msra.mxu0 %v533
        %555 = vmatpush.bf16.msra.mxu0 %v532
        %556 = vmatmul.bf16.gmra.mxu0 %v481
        %v557 = vpop.f32.mrf.mxu0
        %v558 = vadd.f32 %v499, %v557
        %v559 = vpop.f32.mrf.mxu0
        %560 = vdwg.mxu0
        %v562 = vrot.slane %v558, 2
        %563 = vst.sshfl [vmem:[#allocation1] sm:$0xff pattern:$0x73625140] %v285
        %s564 = scalar_lea.vmem [#allocation1], 3
        %v565 = vld [vmem:[%s564] ss:$4 sm:$0xff]
        %566 = vst.sshfl [vmem:[#allocation1 + $0x20] sm:$0xff pattern:$0x73625140] %v286
        %s567 = scalar_lea.vmem [#allocation1], 35
        %v568 = vld [vmem:[%s567] ss:$4 sm:$0xff]
        %569 = vst [vmem:[#allocation1] ss:$4 sm:$0xff] %v565
        %s570 = scalar_lea.vmem [#allocation1], 1
        %571 = vst [vmem:[%s570] ss:$4 sm:$0xff] %v568
        %v572 = vld.sshfl [vmem:[#allocation1] sm:$0xff pattern:$0x73625140]
        %v574 = vpack.c.bf16 %v572, %v572
        %s575 = scalar_lea.vmem %s223, 192 [#allocation6]
        %v576 = vld [vmem:[%s575] sm:$0xf]
        %v577 = vld [vmem:[%s575 + $0x4] sm:$0xf]
        %v578 = vld [vmem:[%s575 + $0x8] sm:$0xf]
        %v579 = vld [vmem:[%s575 + $0xc] sm:$0xf]
        %v580 = vld [vmem:[%s575 + $0x10] sm:$0xf]
        %v581 = vld [vmem:[%s575 + $0x14] sm:$0xf]
        %v582 = vld [vmem:[%s575 + $0x18] sm:$0xf]
        %v583 = vld [vmem:[%s575 + $0x1c] sm:$0xf]
        %v584 = vld [vmem:[%s575 + $0x20] sm:$0xf]
        %v585 = vld [vmem:[%s575 + $0x24] sm:$0xf]
        %v586 = vld [vmem:[%s575 + $0x28] sm:$0xf]
        %v587 = vld [vmem:[%s575 + $0x2c] sm:$0xf]
        %v588 = vld [vmem:[%s575 + $0x30] sm:$0xf]
        %v589 = vld [vmem:[%s575 + $0x34] sm:$0xf]
        %v590 = vld [vmem:[%s575 + $0x38] sm:$0xf]
        %v591 = vld [vmem:[%s575 + $0x3c] sm:$0xf]
        %v592 = vperm.slane %v287, 3
        %v609 = vunpack.c.l.b16 %v576
        %v610 = vunpack.c.l.b16 %v577
        %v611 = vunpack.c.l.b16 %v578
        %v612 = vunpack.c.l.b16 %v579
        %v613 = vunpack.c.l.b16 %v580
        %v614 = vunpack.c.l.b16 %v581
        %v615 = vunpack.c.l.b16 %v582
        %v616 = vunpack.c.l.b16 %v583
        %v617 = vunpack.c.l.b16 %v584
        %v618 = vunpack.c.l.b16 %v585
        %v619 = vunpack.c.l.b16 %v586
        %v620 = vunpack.c.l.b16 %v587
        %v621 = vunpack.c.l.b16 %v588
        %v622 = vunpack.c.l.b16 %v589
        %v623 = vunpack.c.l.b16 %v590
        %v624 = vunpack.c.l.b16 %v591
        %v625 = vpack.c.b16 %v610, %v609
        %v626 = vpack.c.b16 %v612, %v611
        %v627 = vpack.c.b16 %v614, %v613
        %v628 = vpack.c.b16 %v616, %v615
        %v629 = vpack.c.b16 %v618, %v617
        %v630 = vpack.c.b16 %v620, %v619
        %v631 = vpack.c.b16 %v622, %v621
        %v632 = vpack.c.b16 %v624, %v623
        %641 = vmatpush.bf16.msra.mxu0 %v632
        %642 = vmatpush.bf16.msra.mxu0 %v631
        %643 = vmatpush.bf16.msra.mxu0 %v630
        %644 = vmatpush.bf16.msra.mxu0 %v629
        %645 = vmatpush.bf16.msra.mxu0 %v628
        %646 = vmatpush.bf16.msra.mxu0 %v627
        %647 = vmatpush.bf16.msra.mxu0 %v626
        %648 = vmatpush.bf16.msra.mxu0 %v625
        %649 = vmatmul.bf16.gmra.mxu0 %v574
        %v650 = vpop.f32.mrf.mxu0
        %v651 = vadd.f32 %v592, %v650
        %v652 = vpop.f32.mrf.mxu0
        %653 = vdwg.mxu0
        %v655 = vrot.slane %v651, 2
        %s656 = scalar_lea.vmem [#allocation1], 1
        %657 = vst [vmem:[%s656] ss:$4 sm:$0xff] %v465
        %v658 = vld.sshfl [vmem:[#allocation1] sm:$0xff pattern:$0x73625140]
        %s659 = scalar_lea.vmem [#allocation1], 33
        %660 = vst [vmem:[%s659] ss:$4 sm:$0xff] %v469
        %v661 = vld.sshfl [vmem:[#allocation1 + $0x20] sm:$0xff pattern:$0x73625140]
        %s664 = scalar_lea.vmem [#allocation1], 2
        %665 = vst [vmem:[%s664] ss:$4 sm:$0xff] %v558
        %v666 = vld.sshfl [vmem:[#allocation1] sm:$0xff pattern:$0x73625140]
        %s667 = scalar_lea.vmem [#allocation1], 34
        %668 = vst [vmem:[%s667] ss:$4 sm:$0xff] %v562
        %v669 = vld.sshfl [vmem:[#allocation1 + $0x20] sm:$0xff pattern:$0x73625140]
        %s672 = scalar_lea.vmem [#allocation1], 3
        %673 = vst [vmem:[%s672] ss:$4 sm:$0xff] %v651
        %v674 = vld.sshfl [vmem:[#allocation1] sm:$0xff pattern:$0x73625140]
        %s675 = scalar_lea.vmem [#allocation1], 35
        %676 = vst [vmem:[%s675] ss:$4 sm:$0xff] %v655
        %v677 = vld.sshfl [vmem:[#allocation1 + $0x20] sm:$0xff pattern:$0x73625140]
        %vm680 = vcmask 1041408
        %v681 = vsel %vm680, %v371, %v658
        %v682 = vsel %vm680, %v375, %v661
        %vm683 = vcmask 1043456
        %v684 = vsel %vm683, %v681, %v666
        %v685 = vsel %vm683, %v682, %v669
        %vm686 = vcmask 1045504
        %v687 = vsel %vm686, %v684, %v674
        %v688 = vsel %vm686, %v685, %v677
        %v689 = vadd.f32 %v687, %v267
        %v690 = vadd.f32 %v688, %v268
        %691 = vst [vmem:[#allocation2] sm:$0xff] %v689
        %692 = vst [vmem:[#allocation2 + $0x8] sm:$0xff] %v690
        %p693 = scmp.eq.s32.totalorder %s24, 1
        // Predicated region
        $region49: #{tpu_custom_call.1} parent=31 // pred_check
          %p694 = pneg %p693
        $region50: #{tpu_custom_call.1} parent=31 // pred_check_branch
          %696 = sbr.rel (%p694) target = $region52
        $region51: #{tpu_custom_call.1} parent=31 // pred_region
          %697 = vst [vmem:[#allocation9] sm:$0xff] %v689
          %698 = vst [vmem:[#allocation9 + $0x8] sm:$0xff] %v690
        $region52: #{tpu_custom_call.1} parent=31 // pred_fallthru
          _
        // Predicated region
        $region53: #{tpu_custom_call.1} parent=31 // pred_check
          %p699 = pneg %p127
        $region54: #{tpu_custom_call.1} parent=31 // pred_check_branch
          %701 = sbr.rel (%p699) target = $region56
        $region55: #{tpu_custom_call.1} parent=31 // pred_region
          %s702 = smul.u32 2, %s23
          %704 = vsyncadd [#allocation5], 0
          %s705 = smul.addr %s702, 8
          %s706 = scalar_lea.hbm %s3, %s705
          %s707 = sshll.u32 [#allocation9], 4
          %s708 = int_to_ptr.vmem [resolvable:$true] %s707
          %s709 = sshll.u32 %s706, 4
          %s710 = int_to_ptr.hbm [resolvable:$true] %s709
          %715 = dma.vmem_to_hbm [thread:$0]  %s708, 256, %s710, [#allocation5], 128, 128, 8
        $region56: #{tpu_custom_call.1} parent=31 // pred_fallthru
          _
        // Predicated region
        $region57: #{tpu_custom_call.1} parent=31 // pred_check
          %p716 = pneg %p127
        $region58: #{tpu_custom_call.1} parent=31 // pred_check_branch
          %718 = sbr.rel (%p716) target = $region60
        $region59: #{tpu_custom_call.1} parent=31 // pred_region
          %720 = dma.done [#allocation5], 256
        $region60: #{tpu_custom_call.1} parent=31 // pred_fallthru
          _
      $region32: #{tpu_custom_call.1} parent=5 // pred_fallthru
        _
      %p721 = scmp.le.s32.totalorder 2, %s14
      // Predicated region
      $region61: #{tpu_custom_call.1} parent=5 // pred_check
        %p722 = pneg %p721
      $region62: #{tpu_custom_call.1} parent=5 // pred_check_branch
        %724 = sbr.rel (%p722) target = $region64
      $region63: #{tpu_custom_call.1} parent=5 // pred_region
        %s725 = ssub.s32 %s14, 2
      $region64: #{tpu_custom_call.1} parent=5 // pred_fallthru
        _
    $region6: #{tpu_custom_call.1} parent=1 // loop_footer
      %s18 = sadd.s32 1, %s14
    $region7: #{tpu_custom_call.1} parent=1 // loop_footer_branch
      %13 = sbr.rel target = $region3
    $region8: #{tpu_custom_call.1} parent=1 // loop_exit
      _
    %726 = vsyncpa [#allocation4], 1
    %s727 = scalar_lea.sflag [#allocation4], 1
    %728 = vsyncpa %s727, 1
    %729 = vsyncpa [#allocation7], 1
    %s730 = scalar_lea.sflag [#allocation7], 1
    %731 = vsyncpa %s730, 1
    %732 = vsyncpa [#allocation5], 1
    %s733 = scalar_lea.sflag [#allocation5], 1
    %734 = vsyncpa %s733, 1

</llo_original>
